<compile_context>
chip_gen: v7x
topology: tpu7x:2x2x1
jax: 0.10.0
libtpu: 0.0.40
codegen_flags: <defaults>
</compile_context>

<pallas_src>
import jax
import jax.numpy as jnp
from jax.experimental import pallas as pl
from jax.experimental.pallas import tpu as pltpu

NHIDDEN = 128
BN_EPS = 1e-5
_MIB = 1024 * 1024


def _round_up(x, m):
    return (x + m - 1) // m * m


def _cdiv(a, b):
    return (a + b - 1) // b


def _vmem_budget_bytes():
    """Per-generation VMEM budget: physical capacity minus ~8 MiB headroom."""
    try:
        cap = pltpu.get_tpu_info().vmem_capacity_bytes
    except Exception:
        cap = 64 * _MIB  # conservative default (v7x per-TensorCore)
    return max(min(cap - 8 * _MIB, 110 * _MIB), 32 * _MIB)


# ----------------------------- kernels ------------------------------------

def _fused_single_mm_kernel(x_ref, w_ref, b_ref, o_ref):
    # Eval-mode collapse: Linear1(+BN) and Linear2 are back-to-back affine maps
    # (Dropout == identity in eval), pre-folded into a single (idim, odim) W.
    x = x_ref[...].astype(w_ref.dtype)                     # cast in-kernel
    y = jnp.dot(x, w_ref[...], preferred_element_type=jnp.float32) + b_ref[...]
    o_ref[...] = jax.nn.sigmoid(y).astype(o_ref.dtype)     # EUP sigmoid


def _fused_two_mm_kernel(x_ref, w1_ref, b1_ref, w2_ref, b2_ref, o_ref):
    # Used when idim/odim are large enough that collapsing would cost more.
    x = x_ref[...].astype(w1_ref.dtype)
    h = jnp.dot(x, w1_ref[...], preferred_element_type=jnp.float32) + b1_ref[...]
    # Dropout (eval mode) == identity.
    y = jnp.dot(h.astype(w2_ref.dtype), w2_ref[...],
                preferred_element_type=jnp.float32) + b2_ref[...]
    o_ref[...] = jax.nn.sigmoid(y).astype(o_ref.dtype)


# ----------------------------- wrapper -------------------------------------

def future_pred_fc(x, params, *, compute_dtype=jnp.float32, tile_n_max=None):
    """x: [N, idim].  params: dict from init_params.  Returns [N, odim] f32."""
    n, idim = x.shape
    nhidden = params["w1"].shape[1]
    odim = params["w2"].shape[1]
    x_elt = jnp.dtype(x.dtype).itemsize
    w_elt = jnp.dtype(compute_dtype).itemsize

    # ---- parameter prep (once per call, outside the kernel) --------------
    # Fold eval-mode BatchNorm into Linear 1.
    w1 = params["w1"] * params["bn_scale"]
    b1 = params["b1"] * params["bn_scale"] + params["bn_shift"]
    w2, b2 = params["w2"], params["b2"]

    # Eval-mode algebraic collapse of the two affine layers when it shrinks
    # both FLOPs and resident weight bytes (small idim and/or odim).
    collapse = idim * odim < nhidden * (idim + odim)
    if collapse:
        w = jnp.dot(w1, w2, preferred_element_type=jnp.float32).astype(compute_dtype)
        b = (jnp.dot(b1, w2, preferred_element_type=jnp.float32) + b2).astype(jnp.float32)
        operands = (w, b)
        weight_bytes = idim * odim * w_elt + odim * 4
        kernel = _fused_single_mm_kernel
    else:
        operands = (w1.astype(compute_dtype), b1.astype(jnp.float32),
                    w2.astype(compute_dtype), b2.astype(jnp.float32))
        weight_bytes = (idim * nhidden + nhidden * odim) * w_elt + (nhidden + odim) * 4
        kernel = _fused_two_mm_kernel

    # ---- row tiling: solve tile_n from the per-generation VMEM budget ----
    budget = _vmem_budget_bytes()
    per_row = 2 * idim * x_elt + 2 * odim * 4 + odim * 4   # x + out streams + y temp
    if not collapse:
        per_row += nhidden * 4                              # f32 h intermediate
    gen_cap = 2048 if budget >= 96 * _MIB else 1024         # v5e/v6e vs v7x
    if tile_n_max is not None:
        gen_cap = tile_n_max
    tile_cap = max(8, min(gen_cap,
                          (budget - 4 * _MIB - 2 * weight_bytes) // per_row // 8 * 8))
    # Balance tiles across grid steps so the ragged (masked) tail is < 8 rows.
    steps = _cdiv(n, tile_cap)
    tile_n = min(_round_up(_cdiv(n, steps), 8), _round_up(n, 8))
    grid = (_cdiv(n, tile_n),)

    vmem_est = (2 * tile_n * idim * x_elt        # x tile, double-buffered
                + 2 * tile_n * odim * 4          # out tile (f32), double-buffered
                + weight_bytes                   # resident weights/biases
                + tile_n * (odim + (0 if collapse else nhidden)) * 4)
    vmem_limit = int(min(max(2 * vmem_est, 16 * _MIB), budget))

    def build_call(weight_pipeline_mode):
        wkw = ({} if weight_pipeline_mode is None
               else dict(pipeline_mode=weight_pipeline_mode))
        if collapse:
            w_specs = [
                pl.BlockSpec((idim, odim), lambda i: (0, 0), **wkw),   # W (folded)
                pl.BlockSpec((1, odim), lambda i: (0, 0), **wkw),      # B (folded)
            ]
        else:
            w_specs = [
                pl.BlockSpec((idim, nhidden), lambda i: (0, 0), **wkw),   # w1 (BN folded)
                pl.BlockSpec((1, nhidden), lambda i: (0, 0), **wkw),      # b1
                pl.BlockSpec((nhidden, odim), lambda i: (0, 0), **wkw),   # w2
                pl.BlockSpec((1, odim), lambda i: (0, 0), **wkw),         # b2
            ]
        return pl.pallas_call(
            kernel,
            out_shape=jax.ShapeDtypeStruct((n, odim), jnp.float32),   # unpadded output
            grid_spec=pltpu.PrefetchScalarGridSpec(
                num_scalar_prefetch=0,
                grid=grid,
                in_specs=[pl.BlockSpec((tile_n, idim), lambda i: (i, 0))] + w_specs,
                out_specs=pl.BlockSpec((tile_n, odim), lambda i: (i, 0)),
            ),
            compiler_params=pltpu.CompilerParams(
                dimension_semantics=("parallel",),   # megacore-shard row tiles
                vmem_limit_bytes=vmem_limit,
            ),
        )

    # Weights/biases are grid-invariant -> single-buffer them (halves their
    # resident VMEM).  Fall back to default double-buffering if this Pallas
    # build rejects buffer_count=1.
    try:
        return build_call(pl.Buffered(buffer_count=1))(x, *operands)
    except Exception:  # pragma: no cover - older Pallas without single-buffering
        return build_call(None)(x, *operands)


# ----------------------------- params / reference ---------------------------

def init_params(key, idim, odim):
    """Deterministic synthetic parameters matching FuturePredFc.__init__."""
    k1, k2, k3, k4, k5, k6 = jax.random.split(key, 6)
    # nn.Linear(idim, 128): weight [128, idim], bias [128] -> stored transposed.
    w1 = jax.random.normal(k1, (idim, NHIDDEN), jnp.float32) * 0.05
    b1 = jax.random.normal(k2, (1, NHIDDEN), jnp.float32) * 0.05
    # nn.BatchNorm1d(128): gamma, beta, running_mean, running_var (eval mode).
    gamma = 1.0 + 0.1 * jax.random.normal(k3, (1, NHIDDEN), jnp.float32)
    beta = 0.1 * jax.random.normal(k4, (1, NHIDDEN), jnp.float32)
    running_mean = jnp.zeros((1, NHIDDEN), jnp.float32)
    running_var = jnp.ones((1, NHIDDEN), jnp.float32)
    bn_scale = gamma / jnp.sqrt(running_var + BN_EPS)
    bn_shift = beta - running_mean * bn_scale
    # nn.Linear(128, odim): weight [odim, 128], bias [odim] -> stored transposed.
    w2 = jax.random.normal(k5, (NHIDDEN, odim), jnp.float32) * 0.05
    b2 = jax.random.normal(k6, (1, odim), jnp.float32) * 0.05
    return dict(w1=w1, b1=b1, bn_scale=bn_scale, bn_shift=bn_shift, w2=w2, b2=b2)


def reference(x, p):
    """Pure-JAX reference of the same (eval-mode) forward pass."""
    h = x @ p["w1"] + p["b1"]
    h = h * p["bn_scale"] + p["bn_shift"]
    return jax.nn.sigmoid(h @ p["w2"] + p["b2"])


if __name__ == "__main__":
    key = jax.random.PRNGKey(0)
    kx, kp, kx2, kx3, kp3 = jax.random.split(key, 5)

    # Small shapes consistent with the module (single grid step, collapsed path).
    N, IDIM, ODIM = 8, 32, 16
    x = jax.random.normal(kx, (N, IDIM), jnp.float32)
    params = init_params(kp, IDIM, ODIM)

    out = jax.block_until_ready(future_pred_fc(x, params))
    ref = reference(x, params)
    assert out.shape == (N, ODIM)
    assert jnp.allclose(out, ref, atol=2e-5, rtol=2e-5), "f32 mismatch vs reference"

    # Ragged batch (N not a multiple of 8*k tiles): masked last block, no pad copy.
    N2 = 520
    x2 = jax.random.normal(kx2, (N2, IDIM), jnp.float32)
    out2 = jax.block_until_ready(future_pred_fc(x2, params))
    ref2 = reference(x2, params)
    assert out2.shape == (N2, ODIM)
    assert jnp.allclose(out2, ref2, atol=2e-5, rtol=2e-5), "ragged f32 mismatch"

    # bf16 MXU path (f32 accumulate; bias add + sigmoid stay f32), looser tol.
    out_bf16 = jax.block_until_ready(
        future_pred_fc(x2, params, compute_dtype=jnp.bfloat16))
    assert jnp.allclose(out_bf16, ref2, atol=2e-2, rtol=2e-2), "bf16 mismatch"

    # Wide idim/odim exercise the (non-collapsed) two-matmul path.
    N3, IDIM3, ODIM3 = 64, 256, 256
    x3 = jax.random.normal(kx3, (N3, IDIM3), jnp.float32)
    params3 = init_params(kp3, IDIM3, ODIM3)
    out3 = jax.block_until_ready(future_pred_fc(x3, params3))
    ref3 = reference(x3, params3)
    assert out3.shape == (N3, ODIM3)
    assert jnp.allclose(out3, ref3, atol=1e-4, rtol=1e-4), "two-matmul f32 mismatch"

    print("KERNEL_OK")
</pallas_src>

<mosaic_0001>
module attributes {stable_mosaic.version = 11 : i64} {
  func.func @_fused_single_mm_kernel(%arg0: i32, %arg1: memref<8x32xf32, #tpu.memory_space<vmem>>, %arg2: memref<32x16xf32, #tpu.memory_space<vmem>>, %arg3: memref<1x16xf32, #tpu.memory_space<vmem>>, %arg4: memref<8x16xf32, #tpu.memory_space<vmem>>) attributes {dimension_semantics = [#tpu.dimension_semantics<parallel>], iteration_bounds = array<i64: 1>, scalar_prefetch = 0 : i64, scratch_operands = 0 : i64, tpu.core_type = #tpu.core_type<tc>, window_params = [{transform_indices = @transform_0, window_bounds = array<i64: 8, 32>}, {pipeline_mode = #tpu.pipeline_mode<synchronous>, transform_indices = @transform_1, window_bounds = array<i64: 32, 16>}, {pipeline_mode = #tpu.pipeline_mode<synchronous>, transform_indices = @transform_2, window_bounds = array<i64: 1, 16>}, {transform_indices = @transform_3, window_bounds = array<i64: 8, 16>}]} {
    %c0 = arith.constant 0 : index
    %c0_0 = arith.constant 0 : index
    %0 = vector.load %arg1[%c0, %c0_0] : memref<8x32xf32, #tpu.memory_space<vmem>>, vector<8x32xf32>
    %c0_1 = arith.constant 0 : index
    %c0_2 = arith.constant 0 : index
    %1 = vector.load %arg2[%c0_1, %c0_2] : memref<32x16xf32, #tpu.memory_space<vmem>>, vector<32x16xf32>
    %cst = arith.constant dense<0.000000e+00> : vector<8x16xf32>
    %2 = tpu.matmul %0, %1, %cst {dimension_numbers = #tpu.dot_dimension_numbers<[1], [0], [0], [1], [0, 0, 1, 1], [], []>} : vector<8x32xf32>, vector<32x16xf32>, vector<8x16xf32> -> vector<8x16xf32>
    %c0_3 = arith.constant 0 : index
    %c0_4 = arith.constant 0 : index
    %3 = vector.load %arg3[%c0_3, %c0_4] : memref<1x16xf32, #tpu.memory_space<vmem>>, vector<1x16xf32>
    %4 = vector.broadcast %3 : vector<1x16xf32> to vector<8x16xf32>
    %5 = arith.addf %2, %4 : vector<8x16xf32>
    %6 = arith.negf %5 : vector<8x16xf32>
    %7 = math.exp %6 : vector<8x16xf32>
    %cst_5 = arith.constant 1.000000e+00 : f32
    %8 = vector.broadcast %cst_5 : f32 to vector<8x16xf32>
    %9 = arith.addf %8, %7 : vector<8x16xf32>
    %10 = arith.divf %8, %9 : vector<8x16xf32>
    %c0_6 = arith.constant 0 : index
    %c0_7 = arith.constant 0 : index
    %11 = vector.load %arg4[%c0_6, %c0_7] : memref<8x16xf32, #tpu.memory_space<vmem>>, vector<8x16xf32>
    tpu.vector_store %arg4[%c0_6, %c0_7], %10 {strides = array<i32>} : memref<8x16xf32, #tpu.memory_space<vmem>>, vector<8x16xf32>,
    return
  }
  func.func @transform_0(%arg0: i32) -> (i32, i32) {
    %c0_i32 = arith.constant 0 : i32
    %c0_i32_0 = arith.constant 0 : i32
    return %arg0, %c0_i32 : i32, i32
  }
  func.func @transform_1(%arg0: i32) -> (i32, i32) {
    %c0_i32 = arith.constant 0 : i32
    %c0_i32_0 = arith.constant 0 : i32
    %c0_i32_1 = arith.constant 0 : i32
    return %c0_i32, %c0_i32_0 : i32, i32
  }
  func.func @transform_2(%arg0: i32) -> (i32, i32) {
    %c0_i32 = arith.constant 0 : i32
    %c0_i32_0 = arith.constant 0 : i32
    %c0_i32_1 = arith.constant 0 : i32
    return %c0_i32, %c0_i32_0 : i32, i32
  }
  func.func @transform_3(%arg0: i32) -> (i32, i32) {
    %c0_i32 = arith.constant 0 : i32
    %c0_i32_0 = arith.constant 0 : i32
    return %arg0, %c0_i32 : i32, i32
  }
}

module attributes {stable_mosaic.version = 11 : i64} {
  func.func @_fused_single_mm_kernel(%arg0: i32, %arg1: memref<8x32xf32, #tpu.memory_space<vmem>>, %arg2: memref<32x16xf32, #tpu.memory_space<vmem>>, %arg3: memref<1x16xf32, #tpu.memory_space<vmem>>, %arg4: memref<8x16xf32, #tpu.memory_space<vmem>>) attributes {dimension_semantics = [#tpu.dimension_semantics<parallel>], iteration_bounds = array<i64: 1>, scalar_prefetch = 0 : i64, scratch_operands = 0 : i64, tpu.core_type = #tpu.core_type<tc>, window_params = [{transform_indices = @transform_0, window_bounds = array<i64: 8, 32>}, {pipeline_mode = #tpu.pipeline_mode<synchronous>, transform_indices = @transform_1, window_bounds = array<i64: 32, 16>}, {pipeline_mode = #tpu.pipeline_mode<synchronous>, transform_indices = @transform_2, window_bounds = array<i64: 1, 16>}, {transform_indices = @transform_3, window_bounds = array<i64: 8, 16>}]} {
    %c0 = arith.constant 0 : index
    %c0_0 = arith.constant 0 : index
    %0 = vector.load %arg1[%c0, %c0_0] : memref<8x32xf32, #tpu.memory_space<vmem>>, vector<8x32xf32>
    %c0_1 = arith.constant 0 : index
    %c0_2 = arith.constant 0 : index
    %1 = vector.load %arg2[%c0_1, %c0_2] : memref<32x16xf32, #tpu.memory_space<vmem>>, vector<32x16xf32>
    %cst = arith.constant dense<0.000000e+00> : vector<8x16xf32>
    %2 = tpu.matmul %0, %1, %cst {dimension_numbers = #tpu.dot_dimension_numbers<[1], [0], [0], [1], [0, 0, 1, 1], [], []>} : vector<8x32xf32>, vector<32x16xf32>, vector<8x16xf32> -> vector<8x16xf32>
    %c0_3 = arith.constant 0 : index
    %c0_4 = arith.constant 0 : index
    %3 = vector.load %arg3[%c0_3, %c0_4] : memref<1x16xf32, #tpu.memory_space<vmem>>, vector<1x16xf32>
    %4 = vector.broadcast %3 : vector<1x16xf32> to vector<8x16xf32>
    %5 = arith.addf %2, %4 : vector<8x16xf32>
    %6 = arith.negf %5 : vector<8x16xf32>
    %7 = math.exp %6 : vector<8x16xf32>
    %cst_5 = arith.constant 1.000000e+00 : f32
    %8 = vector.broadcast %cst_5 : f32 to vector<8x16xf32>
    %9 = arith.addf %8, %7 : vector<8x16xf32>
    %10 = arith.divf %8, %9 : vector<8x16xf32>
    %c0_6 = arith.constant 0 : index
    %c0_7 = arith.constant 0 : index
    %11 = vector.load %arg4[%c0_6, %c0_7] : memref<8x16xf32, #tpu.memory_space<vmem>>, vector<8x16xf32>
    tpu.vector_store %arg4[%c0_6, %c0_7], %10 {strides = array<i32>} : memref<8x16xf32, #tpu.memory_space<vmem>>, vector<8x16xf32>,
    return
  }
  func.func @transform_0(%arg0: i32) -> (i32, i32) {
    %c0_i32 = arith.constant 0 : i32
    %c0_i32_0 = arith.constant 0 : i32
    return %arg0, %c0_i32 : i32, i32
  }
  func.func @transform_1(%arg0: i32) -> (i32, i32) {
    %c0_i32 = arith.constant 0 : i32
    %c0_i32_0 = arith.constant 0 : i32
    %c0_i32_1 = arith.constant 0 : i32
    return %c0_i32, %c0_i32_0 : i32, i32
  }
  func.func @transform_2(%arg0: i32) -> (i32, i32) {
    %c0_i32 = arith.constant 0 : i32
    %c0_i32_0 = arith.constant 0 : i32
    %c0_i32_1 = arith.constant 0 : i32
    return %c0_i32, %c0_i32_0 : i32, i32
  }
  func.func @transform_3(%arg0: i32) -> (i32, i32) {
    %c0_i32 = arith.constant 0 : i32
    %c0_i32_0 = arith.constant 0 : i32
    return %arg0, %c0_i32 : i32, i32
  }
}

</mosaic_0001>

<llo_original>
// kernel: tpu_custom_call.1
$region0: #{tpu_custom_call.1}
  #allocation0 [shape = 'u32[]', space=smem, size = 0x4, offset = 0x4, fixed_abs, tag = 'smem constant byte address 0x4 - core index']
  #allocation1 [shape = 'u32[144,128]{1,0:T(1,128)}', space=vmem, size = 0x12000, scoped, tag = 'internal scratch']
  %s0 = inlined_call_operand.vmem [shape: f32[8,32], index: 0, kind: input, shape index: {}]
  %s1 = inlined_call_operand.vmem [shape: f32[32,16], index: 1, kind: input, shape index: {}]
  %s2 = inlined_call_operand.vmem [shape: f32[1,16], index: 2, kind: input, shape index: {}]
  %s3 = inlined_call_operand.hbm [shape: f32[8,16], index: 3, kind: output, shape index: {}]
  %s4 = sld [smem:[#allocation0]]
  $region22: #{tpu_custom_call.1} parent=0
    _
  %s6 = ssub.s32 1, %s4
  %s7 = scalar_select 0, %s6, %s4
  $region1: #{tpu_custom_call.1} parent=0
    #allocation2 [shape = 'u8[4096]{0}', space=vmem, size = 0x1000, scoped, tag = 'output window, operand 0, single buffered']
    #allocation3 [shape = 's32[1]{0}', space=sflag, size = 0x4, scoped, tag = 'scoped memory for tpu_custom_call.1']
    %8 = vsyncpa [#allocation3], 0
    // Predicated region
    $region2: #{tpu_custom_call.1} parent=1 // pred_check
      _
    $region3: #{tpu_custom_call.1} parent=1 // pred_check_branch
      %10 = sbr.rel (0) target = $region5
    $region4: #{tpu_custom_call.1} parent=1 // pred_region
      _
    $region5: #{tpu_custom_call.1} parent=1 // pred_fallthru
      _
    // Predicated region
    $region6: #{tpu_custom_call.1} parent=1 // pred_check
      _
    $region7: #{tpu_custom_call.1} parent=1 // pred_check_branch
      %12 = sbr.rel (0) target = $region9
    $region8: #{tpu_custom_call.1} parent=1 // pred_region
      _
    $region9: #{tpu_custom_call.1} parent=1 // pred_fallthru
      _
    // Predicated region
    $region10: #{tpu_custom_call.1} parent=1 // pred_check
      _
    $region11: #{tpu_custom_call.1} parent=1 // pred_check_branch
      %14 = sbr.rel (0) target = $region13
    $region12: #{tpu_custom_call.1} parent=1 // pred_region
      _
    $region13: #{tpu_custom_call.1} parent=1 // pred_fallthru
      _
    %v15 = vld [vmem:[%s0] sm:$0xff]
    %v16 = vld [vmem:[%s1] sm:$0xff]
    %v17 = vld [vmem:[%s1 + $0x8] sm:$0xff]
    %v18 = vld [vmem:[%s1 + $0x10] sm:$0xff]
    %v19 = vld [vmem:[%s1 + $0x18] sm:$0xff]
    %v20 = vld [vmem:[%s2] sm:$0x1]
    %v22 = vlaneseq
    %v23 = vshrl.u32 %v22, 7
    %v24 = vsub.s32 0, %v23
    %v25 = vrot.slane %v20, %v24
    %vm27 = vcmask 261120
    %v29 = vsel %vm27, %v15, 0
    %31 = vmatprep.subr.mxu0 0.0
    %32 = vmatpush1.msra.mxu0 %v16
    %33 = vmatprep.subr.mxu0 0.0
    %34 = vmatpush1.msra.mxu0 %v17
    %35 = vmatprep.subr.mxu0 0.0
    %36 = vmatpush1.msra.mxu0 %v18
    %37 = vmatprep.subr.mxu0 0.0
    %38 = vmatpush1.msra.mxu0 %v19
    %39 = vmatprep.subr.mxu0 0.0
    %40 = vmatpush1.msra.mxu0 0.0
    %41 = vmatprep.subr.mxu0 0.0
    %42 = vmatpush1.msra.mxu0 0.0
    %43 = vmatprep.subr.mxu0 0.0
    %44 = vmatpush1.msra.mxu0 0.0
    %45 = vmatprep.subr.mxu0 0.0
    %46 = vmatpush1.msra.mxu0 0.0
    %47 = vmatprep.subr.mxu0 0.0
    %48 = vmatpush1.msra.mxu0 0.0
    %49 = vmatprep.subr.mxu0 0.0
    %50 = vmatpush1.msra.mxu0 0.0
    %51 = vmatprep.subr.mxu0 0.0
    %52 = vmatpush1.msra.mxu0 0.0
    %53 = vmatprep.subr.mxu0 0.0
    %54 = vmatpush1.msra.mxu0 0.0
    %55 = vmatprep.subr.mxu0 0.0
    %56 = vmatpush1.msra.mxu0 0.0
    %57 = vmatprep.subr.mxu0 0.0
    %58 = vmatpush1.msra.mxu0 0.0
    %59 = vmatprep.subr.mxu0 0.0
    %60 = vmatpush1.msra.mxu0 0.0
    %61 = vmatprep.subr.mxu0 0.0
    %62 = vmatpush1.msra.mxu0 0.0
    %63 = vmatprep.subr.mxu0 0.0
    %64 = vmatpush1.msra.mxu0 0.0
    %65 = vmatprep.subr.mxu0 0.0
    %66 = vmatpush1.msra.mxu0 0.0
    %67 = vmatprep.subr.mxu0 0.0
    %68 = vmatpush1.msra.mxu0 0.0
    %69 = vmatprep.subr.mxu0 0.0
    %70 = vmatpush1.msra.mxu0 0.0
    %71 = vmatprep.subr.mxu0 0.0
    %72 = vmatpush1.msra.mxu0 0.0
    %73 = vmatprep.subr.mxu0 0.0
    %74 = vmatpush1.msra.mxu0 0.0
    %75 = vmatprep.subr.mxu0 0.0
    %76 = vmatpush1.msra.mxu0 0.0
    %77 = vmatprep.subr.mxu0 0.0
    %78 = vmatpush1.msra.mxu0 0.0
    %79 = vmatprep.subr.mxu0 0.0
    %80 = vmatpush1.msra.mxu0 0.0
    %81 = vmatprep.subr.mxu0 0.0
    %82 = vmatpush1.msra.mxu0 0.0
    %83 = vmatprep.subr.mxu0 0.0
    %84 = vmatpush1.msra.mxu0 0.0
    %85 = vmatprep.subr.mxu0 0.0
    %86 = vmatpush1.msra.mxu0 0.0
    %87 = vmatprep.subr.mxu0 0.0
    %88 = vmatpush1.msra.mxu0 0.0
    %89 = vmatprep.subr.mxu0 0.0
    %90 = vmatpush1.msra.mxu0 0.0
    %91 = vmatprep.subr.mxu0 0.0
    %92 = vmatpush1.msra.mxu0 0.0
    %93 = vmatprep.subr.mxu0 0.0
    %94 = vmatpush1.msra.mxu0 0.0
    %95 = vmatprep.mubr.f32.mxu0 0.0
    %96 = vmatmul.mubr.f32.gmra.mrb[0].mxu0 %v29
    %v97 = vpop.f32.mrb[0].mxu0
    %v98 = vadd.f32 %v25, %v97
    %v99 = vpop.f32.mrb[0].mxu0
    %100 = vdwg.mxu0
    %v101 = vxor.u32 %v98, 2147483648
    %v102 = vmul.f32 %v101, 1.442695
    %v103 = vpow.pop %v102
    %v104 = vadd.f32 %v103, 1.0
    %v105 = vrcp.pop %v104
    %v106 = vmul.f32 1.0, %v105
    %vm107 = vcmask 130048
    %108 = vst.msk [vmem:[#allocation2] sm:$0xff] %vm107, %v106
    // Predicated region
    $region14: #{tpu_custom_call.1} parent=1 // pred_check
      _
    $region15: #{tpu_custom_call.1} parent=1 // pred_check_branch
      %110 = sbr.rel (0) target = $region17
    $region16: #{tpu_custom_call.1} parent=1 // pred_region
      %s112 = ssub.s32 128, 128
      %113 = vsyncadd [#allocation3], %s112
      %s115 = sshll.u32 [#allocation2], 4
      %s116 = int_to_ptr.vmem [resolvable:$true] %s115
      %118 = dma.vmem_to_hbm [thread:$0]  %s116, 128, %s3, [#allocation3]
    $region17: #{tpu_custom_call.1} parent=1 // pred_fallthru
      _
    // Predicated region
    $region18: #{tpu_custom_call.1} parent=1 // pred_check
      _
    $region19: #{tpu_custom_call.1} parent=1 // pred_check_branch
      %120 = sbr.rel (0) target = $region21
    $region20: #{tpu_custom_call.1} parent=1 // pred_region
      %121 = dma.done [#allocation3], 128
    $region21: #{tpu_custom_call.1} parent=1 // pred_fallthru
      _
    %122 = vsyncpa [#allocation3], 1

// kernel: tpu_custom_call.1
$region0: #{tpu_custom_call.1}
  #allocation0 [shape = 'u32[]', space=smem, size = 0x4, offset = 0x4, fixed_abs, tag = 'smem constant byte address 0x4 - core index']
  #allocation1 [shape = 'u32[144,128]{1,0:T(1,128)}', space=vmem, size = 0x12000, scoped, tag = 'internal scratch']
  %s0 = inlined_call_operand.vmem [shape: f32[8,32], index: 0, kind: input, shape index: {}]
  %s1 = inlined_call_operand.vmem [shape: f32[32,16], index: 1, kind: input, shape index: {}]
  %s2 = inlined_call_operand.vmem [shape: f32[1,16], index: 2, kind: input, shape index: {}]
  %s3 = inlined_call_operand.hbm [shape: f32[8,16], index: 3, kind: output, shape index: {}]
  %s4 = sld [smem:[#allocation0]]
  $region22: #{tpu_custom_call.1} parent=0
    _
  %s6 = ssub.s32 1, %s4
  %s7 = scalar_select 0, %s6, %s4
  $region1: #{tpu_custom_call.1} parent=0
    #allocation2 [shape = 'u8[4096]{0}', space=vmem, size = 0x1000, scoped, tag = 'output window, operand 0, single buffered']
    #allocation3 [shape = 's32[1]{0}', space=sflag, size = 0x4, scoped, tag = 'scoped memory for tpu_custom_call.1']
    %8 = vsyncpa [#allocation3], 0
    // Predicated region
    $region2: #{tpu_custom_call.1} parent=1 // pred_check
      _
    $region3: #{tpu_custom_call.1} parent=1 // pred_check_branch
      %10 = sbr.rel (0) target = $region5
    $region4: #{tpu_custom_call.1} parent=1 // pred_region
      _
    $region5: #{tpu_custom_call.1} parent=1 // pred_fallthru
      _
    // Predicated region
    $region6: #{tpu_custom_call.1} parent=1 // pred_check
      _
    $region7: #{tpu_custom_call.1} parent=1 // pred_check_branch
      %12 = sbr.rel (0) target = $region9
    $region8: #{tpu_custom_call.1} parent=1 // pred_region
      _
    $region9: #{tpu_custom_call.1} parent=1 // pred_fallthru
      _
    // Predicated region
    $region10: #{tpu_custom_call.1} parent=1 // pred_check
      _
    $region11: #{tpu_custom_call.1} parent=1 // pred_check_branch
      %14 = sbr.rel (0) target = $region13
    $region12: #{tpu_custom_call.1} parent=1 // pred_region
      _
    $region13: #{tpu_custom_call.1} parent=1 // pred_fallthru
      _
    %v15 = vld [vmem:[%s0] sm:$0xff]
    %v16 = vld [vmem:[%s1] sm:$0xff]
    %v17 = vld [vmem:[%s1 + $0x8] sm:$0xff]
    %v18 = vld [vmem:[%s1 + $0x10] sm:$0xff]
    %v19 = vld [vmem:[%s1 + $0x18] sm:$0xff]
    %v20 = vld [vmem:[%s2] sm:$0x1]
    %v22 = vlaneseq
    %v23 = vshrl.u32 %v22, 7
    %v24 = vsub.s32 0, %v23
    %v25 = vrot.slane %v20, %v24
    %vm27 = vcmask 261120
    %v29 = vsel %vm27, %v15, 0
    %31 = vmatprep.subr.mxu0 0.0
    %32 = vmatpush1.msra.mxu0 %v16
    %33 = vmatprep.subr.mxu0 0.0
    %34 = vmatpush1.msra.mxu0 %v17
    %35 = vmatprep.subr.mxu0 0.0
    %36 = vmatpush1.msra.mxu0 %v18
    %37 = vmatprep.subr.mxu0 0.0
    %38 = vmatpush1.msra.mxu0 %v19
    %39 = vmatprep.subr.mxu0 0.0
    %40 = vmatpush1.msra.mxu0 0.0
    %41 = vmatprep.subr.mxu0 0.0
    %42 = vmatpush1.msra.mxu0 0.0
    %43 = vmatprep.subr.mxu0 0.0
    %44 = vmatpush1.msra.mxu0 0.0
    %45 = vmatprep.subr.mxu0 0.0
    %46 = vmatpush1.msra.mxu0 0.0
    %47 = vmatprep.subr.mxu0 0.0
    %48 = vmatpush1.msra.mxu0 0.0
    %49 = vmatprep.subr.mxu0 0.0
    %50 = vmatpush1.msra.mxu0 0.0
    %51 = vmatprep.subr.mxu0 0.0
    %52 = vmatpush1.msra.mxu0 0.0
    %53 = vmatprep.subr.mxu0 0.0
    %54 = vmatpush1.msra.mxu0 0.0
    %55 = vmatprep.subr.mxu0 0.0
    %56 = vmatpush1.msra.mxu0 0.0
    %57 = vmatprep.subr.mxu0 0.0
    %58 = vmatpush1.msra.mxu0 0.0
    %59 = vmatprep.subr.mxu0 0.0
    %60 = vmatpush1.msra.mxu0 0.0
    %61 = vmatprep.subr.mxu0 0.0
    %62 = vmatpush1.msra.mxu0 0.0
    %63 = vmatprep.subr.mxu0 0.0
    %64 = vmatpush1.msra.mxu0 0.0
    %65 = vmatprep.subr.mxu0 0.0
    %66 = vmatpush1.msra.mxu0 0.0
    %67 = vmatprep.subr.mxu0 0.0
    %68 = vmatpush1.msra.mxu0 0.0
    %69 = vmatprep.subr.mxu0 0.0
    %70 = vmatpush1.msra.mxu0 0.0
    %71 = vmatprep.subr.mxu0 0.0
    %72 = vmatpush1.msra.mxu0 0.0
    %73 = vmatprep.subr.mxu0 0.0
    %74 = vmatpush1.msra.mxu0 0.0
    %75 = vmatprep.subr.mxu0 0.0
    %76 = vmatpush1.msra.mxu0 0.0
    %77 = vmatprep.subr.mxu0 0.0
    %78 = vmatpush1.msra.mxu0 0.0
    %79 = vmatprep.subr.mxu0 0.0
    %80 = vmatpush1.msra.mxu0 0.0
    %81 = vmatprep.subr.mxu0 0.0
    %82 = vmatpush1.msra.mxu0 0.0
    %83 = vmatprep.subr.mxu0 0.0
    %84 = vmatpush1.msra.mxu0 0.0
    %85 = vmatprep.subr.mxu0 0.0
    %86 = vmatpush1.msra.mxu0 0.0
    %87 = vmatprep.subr.mxu0 0.0
    %88 = vmatpush1.msra.mxu0 0.0
    %89 = vmatprep.subr.mxu0 0.0
    %90 = vmatpush1.msra.mxu0 0.0
    %91 = vmatprep.subr.mxu0 0.0
    %92 = vmatpush1.msra.mxu0 0.0
    %93 = vmatprep.subr.mxu0 0.0
    %94 = vmatpush1.msra.mxu0 0.0
    %95 = vmatprep.mubr.f32.mxu0 0.0
    %96 = vmatmul.mubr.f32.gmra.mrb[0].mxu0 %v29
    %v97 = vpop.f32.mrb[0].mxu0
    %v98 = vadd.f32 %v25, %v97
    %v99 = vpop.f32.mrb[0].mxu0
    %100 = vdwg.mxu0
    %v101 = vxor.u32 %v98, 2147483648
    %v102 = vmul.f32 %v101, 1.442695
    %v103 = vpow.pop %v102
    %v104 = vadd.f32 %v103, 1.0
    %v105 = vrcp.pop %v104
    %v106 = vmul.f32 1.0, %v105
    %vm107 = vcmask 130048
    %108 = vst.msk [vmem:[#allocation2] sm:$0xff] %vm107, %v106
    // Predicated region
    $region14: #{tpu_custom_call.1} parent=1 // pred_check
      _
    $region15: #{tpu_custom_call.1} parent=1 // pred_check_branch
      %110 = sbr.rel (0) target = $region17
    $region16: #{tpu_custom_call.1} parent=1 // pred_region
      %s112 = ssub.s32 128, 128
      %113 = vsyncadd [#allocation3], %s112
      %s115 = sshll.u32 [#allocation2], 4
      %s116 = int_to_ptr.vmem [resolvable:$true] %s115
      %118 = dma.vmem_to_hbm [thread:$0]  %s116, 128, %s3, [#allocation3]
    $region17: #{tpu_custom_call.1} parent=1 // pred_fallthru
      _
    // Predicated region
    $region18: #{tpu_custom_call.1} parent=1 // pred_check
      _
    $region19: #{tpu_custom_call.1} parent=1 // pred_check_branch
      %120 = sbr.rel (0) target = $region21
    $region20: #{tpu_custom_call.1} parent=1 // pred_region
      %121 = dma.done [#allocation3], 128
    $region21: #{tpu_custom_call.1} parent=1 // pred_fallthru
      _
    %122 = vsyncpa [#allocation3], 1

</llo_original>
